<compile_context>
chip_gen: v7x
topology: tpu7x:2x2x1
jax: 0.10.0
libtpu: 0.0.40
codegen_flags: <defaults>
</compile_context>

<pallas_src>
import functools

import jax
import jax.numpy as jnp
from jax.experimental import pallas as pl
from jax.experimental.pallas import tpu as pltpu

BN_EPS = 1e-5
LEAKY_SLOPE = 0.01  # F.leaky_relu default negative_slope
LANE = 128
NEG_BIG = -1e30     # Python float (a jnp scalar here breaks kernel tracing)


def _round_up(x, m):
    return (x + m - 1) // m * m


def _policy_kernel(x_ref, w1_ref, b1_ref, w2_ref, b2_ref, w3_ref, b3_ref,
                   fused_ref, stats_ref, *, tb, out_dim, true_b):
    def leaky(v):
        # max(v, slope*v) == leaky_relu(v) for slope < 1; one VALU op.
        return jnp.maximum(v, LEAKY_SLOPE * v)

    # BatchNorm is already folded into (w1, b1); obs arrives in bf16.
    x = x_ref[...]

    # fc1 / fc2 / fc3 on the MXU: bf16 operands, f32 accumulation.
    h1 = leaky(jnp.dot(x, w1_ref[...],
                       preferred_element_type=jnp.float32) + b1_ref[...])
    h2 = leaky(jnp.dot(h1.astype(jnp.bfloat16), w2_ref[...],
                       preferred_element_type=jnp.float32) + b2_ref[...])
    out = leaky(jnp.dot(h2.astype(jnp.bfloat16), w3_ref[...],
                        preferred_element_type=jnp.float32) + b3_ref[...])
    # out is (tb, LANE); only the first out_dim lanes are real (w3/b3 zero-pad).

    lane = jax.lax.broadcasted_iota(jnp.int32, out.shape, 1)
    lane_ok = lane < out_dim

    # Softmax / log_softmax over the real out_dim lanes.
    logits = jnp.where(lane_ok, out, NEG_BIG)
    m = jnp.max(logits, axis=1, keepdims=True)
    e = jnp.where(lane_ok, jnp.exp(logits - m), 0.0)
    s = jnp.sum(e, axis=1, keepdims=True)
    r = pl.reciprocal(s, approx=True)
    r = r * (2.0 - s * r)            # one Newton step: sum(probs)==1 to ~1e-7
    probs = e * r
    logp = (logits - m) - jnp.log(s)

    # Pack [out | probs | logp] into ONE lane-dense 128-lane slab
    # (requires 3*out_dim <= 128): single unmasked store per row.
    probs_sh = pltpu.roll(probs, shift=out_dim, axis=1)
    logp_sh = pltpu.roll(logp, shift=2 * out_dim, axis=1)
    packed = jnp.where(lane < out_dim, out,
                       jnp.where(lane < 2 * out_dim, probs_sh,
                                 jnp.where(lane < 3 * out_dim, logp_sh, 0.0)))
    fused_ref[...] = packed

    # Fused per-tile reductions (regularizer + entropy), masking padding.
    row = pl.program_id(0) * tb + jax.lax.broadcasted_iota(jnp.int32, (tb, 1), 0)
    row_ok = row < true_b
    valid = lane_ok & row_ok
    out_sq_sum = jnp.sum(jnp.where(valid, out * out, 0.0))
    ent_rows = -jnp.sum(jnp.where(lane_ok, probs * logp, 0.0),
                        axis=1, keepdims=True)
    ent_sum = jnp.sum(jnp.where(row_ok, ent_rows, 0.0))

    sl = jax.lax.broadcasted_iota(jnp.int32, (8, LANE), 0)
    stats_ref[...] = jnp.where(sl == 0, out_sq_sum,
                               jnp.where(sl == 1, ent_sum, 0.0))


def _run_policy_kernel(x, params):
    B, input_dim = x.shape
    hidden_dim = params["w1"].shape[1]
    out_dim = params["w3"].shape[1]
    assert 3 * out_dim <= LANE, "packed output slab requires 3*out_dim <= 128"

    x = x.astype(jnp.float32)

    # Training-mode BatchNorm statistics over the TRUE batch (biased variance).
    mean = jnp.mean(x, axis=0, keepdims=True)
    var = jnp.mean((x - mean) ** 2, axis=0, keepdims=True)
    rstd = jax.lax.rsqrt(var + BN_EPS)

    # Fold BN into fc1: ((x-mean)*rstd) @ W1 + b1 == x @ (rstd*W1) + (b1 - (mean*rstd)@W1)
    w1f = params["w1"].astype(jnp.float32)
    w1_folded = rstd.reshape(-1, 1) * w1f
    b1_folded = params["b1"].astype(jnp.float32) - (mean * rstd) @ w1f

    # Batch tiling (sublane-aligned). tb=512 amortizes per-step overhead;
    # B > 512 automatically gives >= 2 grid steps for v7x's two TensorCores.
    rows = _round_up(B, 8)
    tb = min(512, rows)
    padded_b = _round_up(rows, tb)
    n_tiles = padded_b // tb

    # bf16 obs for the MXU; pad (if needed) on the bf16 copy, not an f32 copy.
    x_bf = x.astype(jnp.bfloat16)
    if padded_b != B:
        x_bf = jnp.pad(x_bf, ((0, padded_b - B), (0, 0)))

    # bf16 weights for the MXU; pad last layer to a full 128-lane register.
    w1 = w1_folded.astype(jnp.bfloat16)
    w2 = params["w2"].astype(jnp.bfloat16)
    w3 = jnp.pad(params["w3"], ((0, 0), (0, LANE - out_dim))).astype(jnp.bfloat16)
    b1 = b1_folded.astype(jnp.float32)
    b2 = params["b2"].astype(jnp.float32)
    b3 = jnp.pad(params["b3"], ((0, 0), (0, LANE - out_dim))).astype(jnp.float32)

    kernel = functools.partial(_policy_kernel, tb=tb, out_dim=out_dim, true_b=B)

    fixed = lambda i: (0, 0)   # weights/biases stay VMEM-resident (one DMA)
    tiled = lambda i: (i, 0)   # batch-tiled obs / outputs

    flops = 2 * padded_b * (input_dim * hidden_dim
                            + hidden_dim * hidden_dim
                            + hidden_dim * LANE)
    bytes_accessed = (x_bf.size * 2
                      + (w1.size + w2.size + w3.size) * 2
                      + (b1.size + b2.size + b3.size) * 4
                      + padded_b * LANE * 4
                      + n_tiles * 8 * LANE * 4)

    fused, stats = pl.pallas_call(
        kernel,
        out_shape=(
            jax.ShapeDtypeStruct((padded_b, LANE), jnp.float32),
            jax.ShapeDtypeStruct((n_tiles * 8, LANE), jnp.float32),
        ),
        grid_spec=pltpu.PrefetchScalarGridSpec(
            num_scalar_prefetch=0,
            grid=(n_tiles,),
            in_specs=[
                pl.BlockSpec((tb, input_dim), tiled),          # obs tile (bf16)
                pl.BlockSpec((input_dim, hidden_dim), fixed),  # w1 (BN folded)
                pl.BlockSpec((1, hidden_dim), fixed),          # b1 (BN folded)
                pl.BlockSpec((hidden_dim, hidden_dim), fixed), # w2
                pl.BlockSpec((1, hidden_dim), fixed),          # b2
                pl.BlockSpec((hidden_dim, LANE), fixed),       # w3 (padded)
                pl.BlockSpec((1, LANE), fixed),                # b3 (padded)
            ],
            out_specs=(
                pl.BlockSpec((tb, LANE), tiled),               # packed slab
                pl.BlockSpec((8, LANE), tiled),                # per-tile stats
            ),
        ),
        compiler_params=pltpu.CompilerParams(
            dimension_semantics=("parallel",)),
        cost_estimate=pl.CostEstimate(
            flops=flops,
            transcendentals=2 * padded_b * LANE,
            bytes_accessed=bytes_accessed),
    )(x_bf, w1, b1, w2, b2, w3, b3)

    out = fused[:B, 0:out_dim]
    probs = fused[:B, out_dim:2 * out_dim]
    log_probs = fused[:B, 2 * out_dim:3 * out_dim]
    reg_mean_sq = jnp.sum(stats[0::8, 0]) / (B * out_dim)   # (out**2).mean()
    entropy = jnp.sum(stats[1::8, 0]) / B                   # -(p*logp).sum(1).mean()
    return out, probs, log_probs, reg_mean_sq, entropy


def discrete_policy_forward(params, obs, *, sample=True, return_all_probs=False,
                            return_log_pi=False, regularize=False,
                            return_entropy=False, key=None):
    """Mirrors DiscretePolicy.forward."""
    out, probs, log_probs, reg_mean_sq, entropy = _run_policy_kernel(obs, params)
    out_dim = out.shape[1]

    if sample:
        if key is None:
            key = jax.random.PRNGKey(0)
        # categorical_sample(probs): sampling from logits == sampling from probs
        int_act = jax.random.categorical(key, out)                # (B,)
        act = jax.nn.one_hot(int_act, out_dim, dtype=out.dtype)   # (B, out_dim)
    else:
        # onehot_from_logits(probs): greedy argmax one-hot
        int_act = jnp.argmax(probs, axis=1)
        act = jax.nn.one_hot(int_act, out_dim, dtype=out.dtype)

    rets = [act]
    if return_all_probs:
        rets.append(probs)
    if return_log_pi:
        # log_probs.gather(1, int_act) -> shape (B, 1)
        rets.append(jnp.take_along_axis(log_probs, int_act[:, None], axis=1))
    if regularize:
        rets.append([reg_mean_sq])
    if return_entropy:
        rets.append(entropy)
    if len(rets) == 1:
        return rets[0]
    return rets


def init_params(key, input_dim, out_dim, hidden_dim=64):
    """Deterministic parameter init; Linear weights stored transposed as (in, out)."""
    def linear(k, fan_in, fan_out):
        kw, kb = jax.random.split(k)
        bound = 1.0 / jnp.sqrt(fan_in)  # torch nn.Linear default init range
        w = jax.random.uniform(kw, (fan_in, fan_out), jnp.float32, -bound, bound)
        b = jax.random.uniform(kb, (1, fan_out), jnp.float32, -bound, bound)
        return w, b

    k1, k2, k3 = jax.random.split(key, 3)
    w1, b1 = linear(k1, input_dim, hidden_dim)
    w2, b2 = linear(k2, hidden_dim, hidden_dim)
    w3, b3 = linear(k3, hidden_dim, out_dim)
    return {"w1": w1, "b1": b1, "w2": w2, "b2": b2, "w3": w3, "b3": b3}


if __name__ == "__main__":
    # Small shapes consistent with the module: obs (B=8, input_dim=32),
    # hidden_dim=64 (default), out_dim=8 discrete actions.
    B, INPUT_DIM, HIDDEN_DIM, OUT_DIM = 8, 32, 64, 8

    root = jax.random.PRNGKey(0)
    k_param, k_obs, k_sample = jax.random.split(root, 3)

    params = init_params(k_param, INPUT_DIM, OUT_DIM, HIDDEN_DIM)
    obs = jax.random.normal(k_obs, (B, INPUT_DIM), dtype=jnp.float32)

    fwd = jax.jit(functools.partial(
        discrete_policy_forward,
        sample=True, return_all_probs=True, return_log_pi=True,
        regularize=True, return_entropy=True))

    act, probs, log_pi, reg, ent = fwd(params, obs, key=k_sample)
    jax.block_until_ready((act, probs, log_pi, reg[0], ent))

    # Also exercise the deterministic (sample=False) path.
    act_greedy = discrete_policy_forward(params, obs, sample=False)
    jax.block_until_ready(act_greedy)

    assert act.shape == (B, OUT_DIM)
    assert probs.shape == (B, OUT_DIM)
    assert log_pi.shape == (B, 1)
    assert act_greedy.shape == (B, OUT_DIM)
    assert bool(jnp.all(jnp.abs(jnp.sum(probs, axis=1) - 1.0) < 1e-5))

    print("KERNEL_OK")
</pallas_src>

<mosaic_0001>
module attributes {stable_mosaic.version = 11 : i64} {
  func.func @_policy_kernel(%arg0: i32, %arg1: memref<8x32xbf16, #tpu.memory_space<vmem>>, %arg2: memref<32x64xbf16, #tpu.memory_space<vmem>>, %arg3: memref<1x64xf32, #tpu.memory_space<vmem>>, %arg4: memref<64x64xbf16, #tpu.memory_space<vmem>>, %arg5: memref<1x64xf32, #tpu.memory_space<vmem>>, %arg6: memref<64x128xbf16, #tpu.memory_space<vmem>>, %arg7: memref<1x128xf32, #tpu.memory_space<vmem>>, %arg8: memref<8x128xf32, #tpu.memory_space<vmem>>, %arg9: memref<8x128xf32, #tpu.memory_space<vmem>>) attributes {dimension_semantics = [#tpu.dimension_semantics<parallel>], iteration_bounds = array<i64: 1>, scalar_prefetch = 0 : i64, scratch_operands = 0 : i64, tpu.core_type = #tpu.core_type<tc>, window_params = [{transform_indices = @transform_0, window_bounds = array<i64: 8, 32>}, {pipeline_mode = #tpu.pipeline_mode<synchronous>, transform_indices = @transform_1, window_bounds = array<i64: 32, 64>}, {pipeline_mode = #tpu.pipeline_mode<synchronous>, transform_indices = @transform_2, window_bounds = array<i64: 1, 64>}, {pipeline_mode = #tpu.pipeline_mode<synchronous>, transform_indices = @transform_3, window_bounds = array<i64: 64, 64>}, {pipeline_mode = #tpu.pipeline_mode<synchronous>, transform_indices = @transform_4, window_bounds = array<i64: 1, 64>}, {pipeline_mode = #tpu.pipeline_mode<synchronous>, transform_indices = @transform_5, window_bounds = array<i64: 64, 128>}, {pipeline_mode = #tpu.pipeline_mode<synchronous>, transform_indices = @transform_6, window_bounds = array<i64: 1, 128>}, {transform_indices = @transform_7, window_bounds = array<i64: 8, 128>}, {transform_indices = @transform_8, window_bounds = array<i64: 8, 128>}]} {
    %c0 = arith.constant 0 : index
    %c0_0 = arith.constant 0 : index
    %0 = vector.load %arg1[%c0, %c0_0] : memref<8x32xbf16, #tpu.memory_space<vmem>>, vector<8x32xbf16>
    %c0_1 = arith.constant 0 : index
    %c0_2 = arith.constant 0 : index
    %1 = vector.load %arg2[%c0_1, %c0_2] : memref<32x64xbf16, #tpu.memory_space<vmem>>, vector<32x64xbf16>
    %cst = arith.constant dense<0.000000e+00> : vector<8x64xf32>
    %2 = tpu.matmul %0, %1, %cst {dimension_numbers = #tpu.dot_dimension_numbers<[1], [0], [0], [1], [0, 0, 1, 1], [], []>} : vector<8x32xbf16>, vector<32x64xbf16>, vector<8x64xf32> -> vector<8x64xf32>
    %c0_3 = arith.constant 0 : index
    %c0_4 = arith.constant 0 : index
    %3 = vector.load %arg3[%c0_3, %c0_4] : memref<1x64xf32, #tpu.memory_space<vmem>>, vector<1x64xf32>
    %4 = vector.broadcast %3 : vector<1x64xf32> to vector<8x64xf32>
    %5 = arith.addf %2, %4 : vector<8x64xf32>
    %cst_5 = arith.constant 0.00999999977 : f32
    %6 = vector.broadcast %cst_5 : f32 to vector<8x64xf32>
    %7 = arith.mulf %6, %5 : vector<8x64xf32>
    %8 = arith.maximumf %5, %7 : vector<8x64xf32>
    %9 = arith.truncf %8 : vector<8x64xf32> to vector<8x64xbf16>
    %c0_6 = arith.constant 0 : index
    %c0_7 = arith.constant 0 : index
    %10 = vector.load %arg4[%c0_6, %c0_7] : memref<64x64xbf16, #tpu.memory_space<vmem>>, vector<64x64xbf16>
    %cst_8 = arith.constant dense<0.000000e+00> : vector<8x64xf32>
    %11 = tpu.matmul %9, %10, %cst_8 {dimension_numbers = #tpu.dot_dimension_numbers<[1], [0], [0], [1], [0, 0, 1, 1], [], []>} : vector<8x64xbf16>, vector<64x64xbf16>, vector<8x64xf32> -> vector<8x64xf32>
    %c0_9 = arith.constant 0 : index
    %c0_10 = arith.constant 0 : index
    %12 = vector.load %arg5[%c0_9, %c0_10] : memref<1x64xf32, #tpu.memory_space<vmem>>, vector<1x64xf32>
    %13 = vector.broadcast %12 : vector<1x64xf32> to vector<8x64xf32>
    %14 = arith.addf %11, %13 : vector<8x64xf32>
    %cst_11 = arith.constant 0.00999999977 : f32
    %15 = vector.broadcast %cst_11 : f32 to vector<8x64xf32>
    %16 = arith.mulf %15, %14 : vector<8x64xf32>
    %17 = arith.maximumf %14, %16 : vector<8x64xf32>
    %18 = arith.truncf %17 : vector<8x64xf32> to vector<8x64xbf16>
    %c0_12 = arith.constant 0 : index
    %c0_13 = arith.constant 0 : index
    %19 = vector.load %arg6[%c0_12, %c0_13] : memref<64x128xbf16, #tpu.memory_space<vmem>>, vector<64x128xbf16>
    %cst_14 = arith.constant dense<0.000000e+00> : vector<8x128xf32>
    %20 = tpu.matmul %18, %19, %cst_14 {dimension_numbers = #tpu.dot_dimension_numbers<[1], [0], [0], [1], [0, 0, 1, 1], [], []>} : vector<8x64xbf16>, vector<64x128xbf16>, vector<8x128xf32> -> vector<8x128xf32>
    %c0_15 = arith.constant 0 : index
    %c0_16 = arith.constant 0 : index
    %21 = vector.load %arg7[%c0_15, %c0_16] : memref<1x128xf32, #tpu.memory_space<vmem>>, vector<1x128xf32>
    %22 = vector.broadcast %21 : vector<1x128xf32> to vector<8x128xf32>
    %23 = arith.addf %20, %22 : vector<8x128xf32>
    %cst_17 = arith.constant 0.00999999977 : f32
    %24 = vector.broadcast %cst_17 : f32 to vector<8x128xf32>
    %25 = arith.mulf %24, %23 : vector<8x128xf32>
    %26 = arith.maximumf %23, %25 : vector<8x128xf32>
    %27 = tpu.iota {dimensions = array<i32: 1>} : vector<8x128xi32>
    %c8_i32 = arith.constant 8 : i32
    %28 = vector.broadcast %c8_i32 : i32 to vector<8x128xi32>
    %29 = arith.cmpi slt, %27, %28 : vector<8x128xi32>
    %cst_18 = arith.constant -1.000000e+30 : f32
    %30 = vector.broadcast %cst_18 : f32 to vector<8x128xf32>
    %31 = arith.select %29, %26, %30 : vector<8x128xi1>, vector<8x128xf32>
    %cst_19 = arith.constant dense<0xFF800000> : vector<8xf32>
    %32 = vector.multi_reduction <maximumf>, %31, %cst_19 [1] : vector<8x128xf32> to vector<8xf32>
    %33 = vector.shape_cast %32 : vector<8xf32> to vector<8x1xf32>
    %34 = vector.broadcast %33 : vector<8x1xf32> to vector<8x128xf32>
    %35 = arith.subf %31, %34 : vector<8x128xf32>
    %36 = math.exp %35 : vector<8x128xf32>
    %cst_20 = arith.constant 0.000000e+00 : f32
    %37 = vector.broadcast %cst_20 : f32 to vector<8x128xf32>
    %38 = arith.select %29, %36, %37 : vector<8x128xi1>, vector<8x128xf32>
    %cst_21 = arith.constant dense<0.000000e+00> : vector<8xf32>
    %39 = vector.multi_reduction <add>, %38, %cst_21 [1] : vector<8x128xf32> to vector<8xf32>
    %40 = vector.shape_cast %39 : vector<8xf32> to vector<8x1xf32>
    %41 = tpu.reciprocal %40 {approx = true} : vector<8x1xf32> -> vector<8x1xf32>
    %42 = arith.mulf %40, %41 : vector<8x1xf32>
    %cst_22 = arith.constant 2.000000e+00 : f32
    %43 = vector.broadcast %cst_22 : f32 to vector<8x1xf32>
    %44 = arith.subf %43, %42 : vector<8x1xf32>
    %45 = arith.mulf %41, %44 : vector<8x1xf32>
    %46 = vector.broadcast %45 : vector<8x1xf32> to vector<8x128xf32>
    %47 = arith.mulf %38, %46 : vector<8x128xf32>
    %48 = vector.broadcast %33 : vector<8x1xf32> to vector<8x128xf32>
    %49 = arith.subf %31, %48 : vector<8x128xf32>
    %50 = math.log %40 : vector<8x1xf32>
    %51 = vector.broadcast %50 : vector<8x1xf32> to vector<8x128xf32>
    %52 = arith.subf %49, %51 : vector<8x128xf32>
    %c8_i32_23 = arith.constant 8 : i32
    %53 = tpu.dynamic_rotate %47 by %c8_i32_23 dim 1 : vector<8x128xf32>, i32 -> vector<8x128xf32>
    %c16_i32 = arith.constant 16 : i32
    %54 = tpu.dynamic_rotate %52 by %c16_i32 dim 1 : vector<8x128xf32>, i32 -> vector<8x128xf32>
    %c8_i32_24 = arith.constant 8 : i32
    %55 = vector.broadcast %c8_i32_24 : i32 to vector<8x128xi32>
    %56 = arith.cmpi slt, %27, %55 : vector<8x128xi32>
    %c16_i32_25 = arith.constant 16 : i32
    %57 = vector.broadcast %c16_i32_25 : i32 to vector<8x128xi32>
    %58 = arith.cmpi slt, %27, %57 : vector<8x128xi32>
    %c24_i32 = arith.constant 24 : i32
    %59 = vector.broadcast %c24_i32 : i32 to vector<8x128xi32>
    %60 = arith.cmpi slt, %27, %59 : vector<8x128xi32>
    %cst_26 = arith.constant 0.000000e+00 : f32
    %61 = vector.broadcast %cst_26 : f32 to vector<8x128xf32>
    %62 = arith.select %60, %54, %61 : vector<8x128xi1>, vector<8x128xf32>
    %63 = arith.select %58, %53, %62 : vector<8x128xi1>, vector<8x128xf32>
    %64 = arith.select %56, %26, %63 : vector<8x128xi1>, vector<8x128xf32>
    %c0_27 = arith.constant 0 : index
    %c0_28 = arith.constant 0 : index
    %65 = vector.load %arg8[%c0_27, %c0_28] : memref<8x128xf32, #tpu.memory_space<vmem>>, vector<8x128xf32>
    tpu.vector_store %arg8[%c0_27, %c0_28], %64 {strides = array<i32>} : memref<8x128xf32, #tpu.memory_space<vmem>>, vector<8x128xf32>,
    %c8_i32_29 = arith.constant 8 : i32
    %66 = arith.muli %arg0, %c8_i32_29 : i32
    %67 = tpu.iota {dimensions = array<i32: 0>} : vector<8x1xi32>
    %68 = vector.broadcast %66 : i32 to vector<8x1xi32>
    %69 = arith.addi %68, %67 : vector<8x1xi32>
    %c8_i32_30 = arith.constant 8 : i32
    %70 = vector.broadcast %c8_i32_30 : i32 to vector<8x1xi32>
    %71 = arith.cmpi slt, %69, %70 : vector<8x1xi32>
    %72 = vector.broadcast %71 : vector<8x1xi1> to vector<8x128xi1>
    %73 = arith.andi %29, %72 : vector<8x128xi1>
    %74 = arith.mulf %26, %26 : vector<8x128xf32>
    %cst_31 = arith.constant 0.000000e+00 : f32
    %75 = vector.broadcast %cst_31 : f32 to vector<8x128xf32>
    %76 = arith.select %73, %74, %75 : vector<8x128xi1>, vector<8x128xf32>
    %77 = vector.shape_cast %76 : vector<8x128xf32> to vector<1x8x128xf32>
    %cst_32 = arith.constant dense<0.000000e+00> : vector<1xf32>
    %78 = vector.multi_reduction <add>, %77, %cst_32 [1, 2] : vector<1x8x128xf32> to vector<1xf32>
    %79 = vector.shape_cast %78 : vector<1xf32> to vector<1x1x1xf32>
    %80 = vector.extract %79[0, 0, 0] : f32 from vector<1x1x1xf32>
    %81 = arith.mulf %47, %52 : vector<8x128xf32>
    %cst_33 = arith.constant 0.000000e+00 : f32
    %82 = vector.broadcast %cst_33 : f32 to vector<8x128xf32>
    %83 = arith.select %29, %81, %82 : vector<8x128xi1>, vector<8x128xf32>
    %cst_34 = arith.constant dense<0.000000e+00> : vector<8xf32>
    %84 = vector.multi_reduction <add>, %83, %cst_34 [1] : vector<8x128xf32> to vector<8xf32>
    %85 = vector.shape_cast %84 : vector<8xf32> to vector<8x1xf32>
    %cst_35 = arith.constant 0.000000e+00 : f32
    %86 = vector.broadcast %cst_35 : f32 to vector<8x1xf32>
    %87 = arith.subf %86, %85 : vector<8x1xf32>
    %cst_36 = arith.constant 0.000000e+00 : f32
    %88 = vector.broadcast %cst_36 : f32 to vector<8x1xf32>
    %89 = arith.select %71, %87, %88 : vector<8x1xi1>, vector<8x1xf32>
    %90 = vector.shape_cast %89 : vector<8x1xf32> to vector<1x8x1xf32>
    %cst_37 = arith.constant dense<0.000000e+00> : vector<1xf32>
    %91 = vector.multi_reduction <add>, %90, %cst_37 [1, 2] : vector<1x8x1xf32> to vector<1xf32>
    %92 = vector.shape_cast %91 : vector<1xf32> to vector<1x1x1xf32>
    %93 = vector.extract %92[0, 0, 0] : f32 from vector<1x1x1xf32>
    %94 = tpu.iota {dimensions = array<i32: 0>} : vector<8x128xi32>
    %c0_i32 = arith.constant 0 : i32
    %95 = vector.broadcast %c0_i32 : i32 to vector<8x128xi32>
    %96 = arith.cmpi eq, %94, %95 : vector<8x128xi32>
    %c1_i32 = arith.constant 1 : i32
    %97 = vector.broadcast %c1_i32 : i32 to vector<8x128xi32>
    %98 = arith.cmpi eq, %94, %97 : vector<8x128xi32>
    %cst_38 = arith.constant 0.000000e+00 : f32
    %99 = vector.broadcast %93 : f32 to vector<8x128xf32>
    %100 = vector.broadcast %cst_38 : f32 to vector<8x128xf32>
    %101 = arith.select %98, %99, %100 : vector<8x128xi1>, vector<8x128xf32>
    %102 = vector.broadcast %80 : f32 to vector<8x128xf32>
    %103 = arith.select %96, %102, %101 : vector<8x128xi1>, vector<8x128xf32>
    %c0_39 = arith.constant 0 : index
    %c0_40 = arith.constant 0 : index
    %104 = vector.load %arg9[%c0_39, %c0_40] : memref<8x128xf32, #tpu.memory_space<vmem>>, vector<8x128xf32>
    tpu.vector_store %arg9[%c0_39, %c0_40], %103 {strides = array<i32>} : memref<8x128xf32, #tpu.memory_space<vmem>>, vector<8x128xf32>,
    return
  }
  func.func @transform_0(%arg0: i32) -> (i32, i32) {
    %c0_i32 = arith.constant 0 : i32
    %c0_i32_0 = arith.constant 0 : i32
    return %arg0, %c0_i32 : i32, i32
  }
  func.func @transform_1(%arg0: i32) -> (i32, i32) {
    %c0_i32 = arith.constant 0 : i32
    %c0_i32_0 = arith.constant 0 : i32
    %c0_i32_1 = arith.constant 0 : i32
    return %c0_i32, %c0_i32_0 : i32, i32
  }
  func.func @transform_2(%arg0: i32) -> (i32, i32) {
    %c0_i32 = arith.constant 0 : i32
    %c0_i32_0 = arith.constant 0 : i32
    %c0_i32_1 = arith.constant 0 : i32
    return %c0_i32, %c0_i32_0 : i32, i32
  }
  func.func @transform_3(%arg0: i32) -> (i32, i32) {
    %c0_i32 = arith.constant 0 : i32
    %c0_i32_0 = arith.constant 0 : i32
    %c0_i32_1 = arith.constant 0 : i32
    return %c0_i32, %c0_i32_0 : i32, i32
  }
  func.func @transform_4(%arg0: i32) -> (i32, i32) {
    %c0_i32 = arith.constant 0 : i32
    %c0_i32_0 = arith.constant 0 : i32
    %c0_i32_1 = arith.constant 0 : i32
    return %c0_i32, %c0_i32_0 : i32, i32
  }
  func.func @transform_5(%arg0: i32) -> (i32, i32) {
    %c0_i32 = arith.constant 0 : i32
    %c0_i32_0 = arith.constant 0 : i32
    %c0_i32_1 = arith.constant 0 : i32
    return %c0_i32, %c0_i32_0 : i32, i32
  }
  func.func @transform_6(%arg0: i32) -> (i32, i32) {
    %c0_i32 = arith.constant 0 : i32
    %c0_i32_0 = arith.constant 0 : i32
    %c0_i32_1 = arith.constant 0 : i32
    return %c0_i32, %c0_i32_0 : i32, i32
  }
  func.func @transform_7(%arg0: i32) -> (i32, i32) {
    %c0_i32 = arith.constant 0 : i32
    %c0_i32_0 = arith.constant 0 : i32
    return %arg0, %c0_i32 : i32, i32
  }
  func.func @transform_8(%arg0: i32) -> (i32, i32) {
    %c0_i32 = arith.constant 0 : i32
    %c0_i32_0 = arith.constant 0 : i32
    return %arg0, %c0_i32 : i32, i32
  }
}

</mosaic_0001>

<llo_original>
// kernel: discrete_policy_forward.1
$region0: #{discrete_policy_forward.1}
  #allocation0 [shape = 'u32[]', space=smem, size = 0x4, offset = 0x4, fixed_abs, tag = 'smem constant byte address 0x4 - core index']
  #allocation1 [shape = 'u32[144,128]{1,0:T(1,128)}', space=vmem, size = 0x12000, scoped, tag = 'internal scratch']
  %s0 = inlined_call_operand.vmem [shape: bf16[8,32], index: 0, kind: input, shape index: {}]
  %s1 = inlined_call_operand.vmem [shape: bf16[32,64], index: 1, kind: input, shape index: {}]
  %s2 = inlined_call_operand.vmem [shape: f32[1,64], index: 2, kind: input, shape index: {}]
  %s3 = inlined_call_operand.vmem [shape: bf16[64,64], index: 3, kind: input, shape index: {}]
  %s4 = inlined_call_operand.vmem [shape: f32[1,64], index: 4, kind: input, shape index: {}]
  %s5 = inlined_call_operand.vmem [shape: bf16[64,128], index: 5, kind: input, shape index: {}]
  %s6 = inlined_call_operand.vmem [shape: f32[1,128], index: 6, kind: input, shape index: {}]
  %s7 = inlined_call_operand.vmem [shape: f32[8,128], index: 7, kind: output, shape index: {0}]
  %s8 = inlined_call_operand.vmem [shape: f32[8,128], index: 8, kind: output, shape index: {1}]
  %9 = xla_tuple %s7, %s8
  %s10 = sld [smem:[#allocation0]]
  $region46: #{discrete_policy_forward.1} parent=0
    _
  %s12 = ssub.s32 1, %s10
  %s13 = scalar_select 0, %s12, %s10
  // Predicated region
  $region2: #{discrete_policy_forward.1} parent=0 // pred_check
    _
  $region3: #{discrete_policy_forward.1} parent=0 // pred_check_branch
    %15 = sbr.rel (0) target = $region5
  $region4: #{discrete_policy_forward.1} parent=0 // pred_region
    _
  $region5: #{discrete_policy_forward.1} parent=0 // pred_fallthru
    _
  // Predicated region
  $region6: #{discrete_policy_forward.1} parent=0 // pred_check
    _
  $region7: #{discrete_policy_forward.1} parent=0 // pred_check_branch
    %17 = sbr.rel (0) target = $region9
  $region8: #{discrete_policy_forward.1} parent=0 // pred_region
    _
  $region9: #{discrete_policy_forward.1} parent=0 // pred_fallthru
    _
  // Predicated region
  $region10: #{discrete_policy_forward.1} parent=0 // pred_check
    _
  $region11: #{discrete_policy_forward.1} parent=0 // pred_check_branch
    %19 = sbr.rel (0) target = $region13
  $region12: #{discrete_policy_forward.1} parent=0 // pred_region
    _
  $region13: #{discrete_policy_forward.1} parent=0 // pred_fallthru
    _
  // Predicated region
  $region14: #{discrete_policy_forward.1} parent=0 // pred_check
    _
  $region15: #{discrete_policy_forward.1} parent=0 // pred_check_branch
    %21 = sbr.rel (0) target = $region17
  $region16: #{discrete_policy_forward.1} parent=0 // pred_region
    _
  $region17: #{discrete_policy_forward.1} parent=0 // pred_fallthru
    _
  // Predicated region
  $region18: #{discrete_policy_forward.1} parent=0 // pred_check
    _
  $region19: #{discrete_policy_forward.1} parent=0 // pred_check_branch
    %23 = sbr.rel (0) target = $region21
  $region20: #{discrete_policy_forward.1} parent=0 // pred_region
    _
  $region21: #{discrete_policy_forward.1} parent=0 // pred_fallthru
    _
  // Predicated region
  $region22: #{discrete_policy_forward.1} parent=0 // pred_check
    _
  $region23: #{discrete_policy_forward.1} parent=0 // pred_check_branch
    %25 = sbr.rel (0) target = $region25
  $region24: #{discrete_policy_forward.1} parent=0 // pred_region
    _
  $region25: #{discrete_policy_forward.1} parent=0 // pred_fallthru
    _
  // Predicated region
  $region26: #{discrete_policy_forward.1} parent=0 // pred_check
    _
  $region27: #{discrete_policy_forward.1} parent=0 // pred_check_branch
    %27 = sbr.rel (0) target = $region29
  $region28: #{discrete_policy_forward.1} parent=0 // pred_region
    _
  $region29: #{discrete_policy_forward.1} parent=0 // pred_fallthru
    _
  %v29 = vld [vmem:[%s0] sm:$0xf]
  %v30 = vld [vmem:[%s1] sm:$0xf]
  %v31 = vld [vmem:[%s1 + $0x4] sm:$0xf]
  %v32 = vld [vmem:[%s1 + $0x8] sm:$0xf]
  %v33 = vld [vmem:[%s1 + $0xc] sm:$0xf]
  %v34 = vld [vmem:[%s2] sm:$0x1]
  %v36 = vlaneseq
  %v37 = vshrl.u32 %v36, 7
  %v38 = vsub.s32 0, %v37
  %v39 = vrot.slane %v34, %v38
  %v45 = vunpack.c.l.b16 %v30
  %v46 = vunpack.c.l.b16 %v31
  %v47 = vunpack.c.l.b16 %v32
  %v48 = vunpack.c.l.b16 %v33
  %v49 = vpack.c.b16 %v46, %v45
  %v50 = vpack.c.b16 %v48, %v47
  %vm53 = vcmask 261120
  %v55 = vsel %vm53, %v29, 0
  %57 = vmatprep.subr.bf16.mxu0 0
  %58 = vmatpush1.bf16.msra.mxu0 %v49
  %59 = vmatprep.subr.bf16.mxu0 0
  %60 = vmatpush1.bf16.msra.mxu0 %v50
  %61 = vmatprep.subr.bf16.mxu0 0
  %62 = vmatpush1.bf16.msra.mxu0 0
  %63 = vmatprep.subr.bf16.mxu0 0
  %64 = vmatpush1.bf16.msra.mxu0 0
  %65 = vmatprep.subr.bf16.mxu0 0
  %66 = vmatpush1.bf16.msra.mxu0 0
  %67 = vmatprep.subr.bf16.mxu0 0
  %68 = vmatpush1.bf16.msra.mxu0 0
  %69 = vmatprep.subr.bf16.mxu0 0
  %70 = vmatpush1.bf16.msra.mxu0 0
  %71 = vmatprep.subr.bf16.mxu0 0
  %72 = vmatpush1.bf16.msra.mxu0 0
  %73 = vmatprep.subr.bf16.mxu0 0
  %74 = vmatpush1.bf16.msra.mxu0 0
  %75 = vmatprep.subr.bf16.mxu0 0
  %76 = vmatpush1.bf16.msra.mxu0 0
  %77 = vmatprep.subr.bf16.mxu0 0
  %78 = vmatpush1.bf16.msra.mxu0 0
  %79 = vmatprep.subr.bf16.mxu0 0
  %80 = vmatpush1.bf16.msra.mxu0 0
  %81 = vmatprep.subr.bf16.mxu0 0
  %82 = vmatpush1.bf16.msra.mxu0 0
  %83 = vmatprep.subr.bf16.mxu0 0
  %84 = vmatpush1.bf16.msra.mxu0 0
  %85 = vmatprep.subr.bf16.mxu0 0
  %86 = vmatpush1.bf16.msra.mxu0 0
  %87 = vmatprep.subr.bf16.mxu0 0
  %88 = vmatpush1.bf16.msra.mxu0 0
  %89 = vmatprep.mubr.bf16.mxu0 0
  %90 = vmatmul.mubr.bf16.gmra.mrb[0].mxu0 %v55
  %v91 = vpop.f32.mrb[0].mxu0
  %v92 = vadd.f32 %v39, %v91
  %v93 = vpop.f32.mrb[0].mxu0
  %v94 = vpop.f32.mrb[0].mxu0
  %v95 = vpop.f32.mrb[0].mxu0
  %96 = vdwg.mxu0
  %v97 = vmul.f32 %v92, 0.01
  %v98 = vmax.f32 %v92, %v97
  %v99 = vpack.c.bf16 %v98, %v98
  %v100 = vld [vmem:[%s3] sm:$0xf]
  %v101 = vld [vmem:[%s3 + $0x4] sm:$0xf]
  %v102 = vld [vmem:[%s3 + $0x8] sm:$0xf]
  %v103 = vld [vmem:[%s3 + $0xc] sm:$0xf]
  %v104 = vld [vmem:[%s3 + $0x10] sm:$0xf]
  %v105 = vld [vmem:[%s3 + $0x14] sm:$0xf]
  %v106 = vld [vmem:[%s3 + $0x18] sm:$0xf]
  %v107 = vld [vmem:[%s3 + $0x1c] sm:$0xf]
  %v108 = vld [vmem:[%s4] sm:$0x1]
  %v110 = vlaneseq
  %v111 = vshrl.u32 %v110, 7
  %v112 = vsub.s32 0, %v111
  %v113 = vrot.slane %v108, %v112
  %v123 = vunpack.c.l.b16 %v100
  %v124 = vunpack.c.l.b16 %v101
  %v125 = vunpack.c.l.b16 %v102
  %v126 = vunpack.c.l.b16 %v103
  %v127 = vunpack.c.l.b16 %v104
  %v128 = vunpack.c.l.b16 %v105
  %v129 = vunpack.c.l.b16 %v106
  %v130 = vunpack.c.l.b16 %v107
  %v131 = vpack.c.b16 %v124, %v123
  %v132 = vpack.c.b16 %v126, %v125
  %v133 = vpack.c.b16 %v128, %v127
  %v134 = vpack.c.b16 %v130, %v129
  %vm139 = vcmask 523264
  %v141 = vsel %vm139, %v99, 0
  %143 = vmatprep.subr.bf16.mxu0 0
  %144 = vmatpush1.bf16.msra.mxu0 %v131
  %145 = vmatprep.subr.bf16.mxu0 0
  %146 = vmatpush1.bf16.msra.mxu0 %v132
  %147 = vmatprep.subr.bf16.mxu0 0
  %148 = vmatpush1.bf16.msra.mxu0 %v133
  %149 = vmatprep.subr.bf16.mxu0 0
  %150 = vmatpush1.bf16.msra.mxu0 %v134
  %151 = vmatprep.subr.bf16.mxu0 0
  %152 = vmatpush1.bf16.msra.mxu0 0
  %153 = vmatprep.subr.bf16.mxu0 0
  %154 = vmatpush1.bf16.msra.mxu0 0
  %155 = vmatprep.subr.bf16.mxu0 0
  %156 = vmatpush1.bf16.msra.mxu0 0
  %157 = vmatprep.subr.bf16.mxu0 0
  %158 = vmatpush1.bf16.msra.mxu0 0
  %159 = vmatprep.subr.bf16.mxu0 0
  %160 = vmatpush1.bf16.msra.mxu0 0
  %161 = vmatprep.subr.bf16.mxu0 0
  %162 = vmatpush1.bf16.msra.mxu0 0
  %163 = vmatprep.subr.bf16.mxu0 0
  %164 = vmatpush1.bf16.msra.mxu0 0
  %165 = vmatprep.subr.bf16.mxu0 0
  %166 = vmatpush1.bf16.msra.mxu0 0
  %167 = vmatprep.subr.bf16.mxu0 0
  %168 = vmatpush1.bf16.msra.mxu0 0
  %169 = vmatprep.subr.bf16.mxu0 0
  %170 = vmatpush1.bf16.msra.mxu0 0
  %171 = vmatprep.subr.bf16.mxu0 0
  %172 = vmatpush1.bf16.msra.mxu0 0
  %173 = vmatprep.subr.bf16.mxu0 0
  %174 = vmatpush1.bf16.msra.mxu0 0
  %175 = vmatprep.mubr.bf16.mxu0 0
  %176 = vmatmul.mubr.bf16.gmra.mrb[0].mxu0 %v141
  %v177 = vpop.f32.mrb[0].mxu0
  %v178 = vadd.f32 %v113, %v177
  %v179 = vpop.f32.mrb[0].mxu0
  %v180 = vpop.f32.mrb[0].mxu0
  %v181 = vpop.f32.mrb[0].mxu0
  %182 = vdwg.mxu0
  %v183 = vmul.f32 %v178, 0.01
  %v184 = vmax.f32 %v178, %v183
  %v185 = vpack.c.bf16 %v184, %v184
  %v186 = vld [vmem:[%s5] sm:$0xf]
  %v187 = vld [vmem:[%s5 + $0x4] sm:$0xf]
  %v188 = vld [vmem:[%s5 + $0x8] sm:$0xf]
  %v189 = vld [vmem:[%s5 + $0xc] sm:$0xf]
  %v190 = vld [vmem:[%s5 + $0x10] sm:$0xf]
  %v191 = vld [vmem:[%s5 + $0x14] sm:$0xf]
  %v192 = vld [vmem:[%s5 + $0x18] sm:$0xf]
  %v193 = vld [vmem:[%s5 + $0x1c] sm:$0xf]
  %v194 = vld [vmem:[%s6] sm:$0x1]
  %v196 = vlaneseq
  %v197 = vshrl.u32 %v196, 7
  %v198 = vsub.s32 0, %v197
  %v199 = vrot.slane %v194, %v198
  %v209 = vunpack.c.l.b16 %v186
  %v210 = vunpack.c.l.b16 %v187
  %v211 = vunpack.c.l.b16 %v188
  %v212 = vunpack.c.l.b16 %v189
  %v213 = vunpack.c.l.b16 %v190
  %v214 = vunpack.c.l.b16 %v191
  %v215 = vunpack.c.l.b16 %v192
  %v216 = vunpack.c.l.b16 %v193
  %v217 = vpack.c.b16 %v210, %v209
  %v218 = vpack.c.b16 %v212, %v211
  %v219 = vpack.c.b16 %v214, %v213
  %v220 = vpack.c.b16 %v216, %v215
  %v226 = vsel %vm139, %v185, 0
  %228 = vmatprep.subr.bf16.mxu0 0
  %229 = vmatpush1.bf16.msra.mxu0 %v217
  %230 = vmatprep.subr.bf16.mxu0 0
  %231 = vmatpush1.bf16.msra.mxu0 %v218
  %232 = vmatprep.subr.bf16.mxu0 0
  %233 = vmatpush1.bf16.msra.mxu0 %v219
  %234 = vmatprep.subr.bf16.mxu0 0
  %235 = vmatpush1.bf16.msra.mxu0 %v220
  %236 = vmatprep.subr.bf16.mxu0 0
  %237 = vmatpush1.bf16.msra.mxu0 0
  %238 = vmatprep.subr.bf16.mxu0 0
  %239 = vmatpush1.bf16.msra.mxu0 0
  %240 = vmatprep.subr.bf16.mxu0 0
  %241 = vmatpush1.bf16.msra.mxu0 0
  %242 = vmatprep.subr.bf16.mxu0 0
  %243 = vmatpush1.bf16.msra.mxu0 0
  %244 = vmatprep.subr.bf16.mxu0 0
  %245 = vmatpush1.bf16.msra.mxu0 0
  %246 = vmatprep.subr.bf16.mxu0 0
  %247 = vmatpush1.bf16.msra.mxu0 0
  %248 = vmatprep.subr.bf16.mxu0 0
  %249 = vmatpush1.bf16.msra.mxu0 0
  %250 = vmatprep.subr.bf16.mxu0 0
  %251 = vmatpush1.bf16.msra.mxu0 0
  %252 = vmatprep.subr.bf16.mxu0 0
  %253 = vmatpush1.bf16.msra.mxu0 0
  %254 = vmatprep.subr.bf16.mxu0 0
  %255 = vmatpush1.bf16.msra.mxu0 0
  %256 = vmatprep.subr.bf16.mxu0 0
  %257 = vmatpush1.bf16.msra.mxu0 0
  %258 = vmatprep.subr.bf16.mxu0 0
  %259 = vmatpush1.bf16.msra.mxu0 0
  %260 = vmatprep.mubr.bf16.mxu0 0
  %261 = vmatmul.mubr.bf16.gmra.mrb[0].mxu0 %v226
  %v262 = vpop.f32.mrb[0].mxu0
  %v263 = vadd.f32 %v199, %v262
  %v264 = vpop.f32.mrb[0].mxu0
  %v265 = vpop.f32.mrb[0].mxu0
  %v266 = vpop.f32.mrb[0].mxu0
  %267 = vdwg.mxu0
  %v268 = vmul.f32 %v263, 0.01
  %v269 = vmax.f32 %v263, %v268
  %v270 = vlaneseq
  %v271 = vand.u32 %v270, 127
  %vm272 = vcmp.lt.s32.totalorder %v271, 8
  %v273 = vsel %vm272, %v269, -1e+30
  %274 = vmax.xlane.f32.xlu0 %v273
  %v275 = vpop.xlane.xlu0 %274
  %v276 = vsub.f32 %v273, %v275
  %v277 = vmul.f32 %v276, 1.442695
  %v278 = vpow.pop %v277
  %v279 = vsel %vm272, %v278, 0.0
  %280 = vadd.xlane.f32.xlu0 %v279
  %v281 = vpop.xlane.xlu0 %280
  %v282 = vrcp.pop %v281
  %v283 = vmul.f32 %v281, %v282
  %v284 = vsub.f32 2.0, %v283
  %v285 = vmul.f32 %v282, %v284
  %v286 = vmul.f32 %v279, %v285
  %v287 = vlog2.pop %v281
  %v288 = vmul.f32 %v287, 0.6931472
  %v289 = vsub.f32 %v276, %v288
  %290 = vrot.lane.b32.xlu0 %v286, 8
  %v291 = vpop.permute.xlu0 %290
  %292 = vrot.lane.b32.xlu0 %v289, 16
  %v293 = vpop.permute.xlu0 %292
  %vm294 = vcmp.lt.s32.totalorder %v271, 16
  %vm295 = vcmp.lt.s32.totalorder %v271, 24
  %v296 = vsel %vm295, %v293, 0.0
  %v297 = vsel %vm294, %v291, %v296
  %v298 = vsel %vm272, %v269, %v297
  %299 = vst [vmem:[%s7] sm:$0xff] %v298
  %s300 = smul.u32 0, 8
  %v301 = vlaneseq
  %v302 = vshrl.u32 %v301, 7
  %v303 = vstv %s300
  %v304 = vadd.s32 %v303, %v302
  %vm305 = vcmp.lt.s32.totalorder %v304, 8
  %v306 = vsel %vm305, 1, 0
  %vm307 = vcmp.eq.s32.totalorder %v306, 1
  %vm308 = vmand %vm272, %vm307
  %v309 = vmul.f32 %v269, %v269
  %v310 = vsel %vm308, %v309, 0.0
  %311 = vadd.xlane.f32.xlu0 %v310
  %v312 = vpop.xlane.xlu0 %311
  %v313 = vrot.slane %v312, 4
  %v314 = vadd.f32 %v312, %v313
  %v315 = vrot.slane %v314, 2
  %v316 = vadd.f32 %v314, %v315
  %v317 = vrot.slane %v316, 1
  %v318 = vadd.f32 %v316, %v317
  %s319 = vtos %v318
  %v320 = vmul.f32 %v286, %v289
  %v321 = vsel %vm272, %v320, 0.0
  %322 = vadd.xlane.f32.xlu0 %v321
  %v323 = vpop.xlane.xlu0 %322
  %v324 = vsub.f32 0.0, %v323
  %v325 = vsel %vm305, %v324, 0.0
  %vm326 = vcmask 7168
  %v327 = vsel %vm326, %v325, 0.0
  %328 = vadd.xlane.f32.xlu0 %v327
  %v329 = vpop.xlane.xlu0 %328
  %v330 = vrot.slane %v329, 4
  %v331 = vadd.f32 %v329, %v330
  %v332 = vrot.slane %v331, 2
  %v333 = vadd.f32 %v331, %v332
  %v334 = vrot.slane %v333, 1
  %v335 = vadd.f32 %v333, %v334
  %s336 = vtos %v335
  %vm337 = vcmp.eq.s32.totalorder %v302, 0
  %vm338 = vcmp.eq.s32.totalorder %v302, 1
  %v339 = vstv %s336
  %v340 = vsel %vm338, %v339, 0.0
  %v341 = vstv %s319
  %v342 = vsel %vm337, %v341, %v340
  %343 = vst [vmem:[%s8] sm:$0xff] %v342
  // Predicated region
  $region30: #{discrete_policy_forward.1} parent=0 // pred_check
    _
  $region31: #{discrete_policy_forward.1} parent=0 // pred_check_branch
    %345 = sbr.rel (0) target = $region33
  $region32: #{discrete_policy_forward.1} parent=0 // pred_region
    _
  $region33: #{discrete_policy_forward.1} parent=0 // pred_fallthru
    _
  // Predicated region
  $region34: #{discrete_policy_forward.1} parent=0 // pred_check
    _
  $region35: #{discrete_policy_forward.1} parent=0 // pred_check_branch
    %347 = sbr.rel (0) target = $region37
  $region36: #{discrete_policy_forward.1} parent=0 // pred_region
    _
  $region37: #{discrete_policy_forward.1} parent=0 // pred_fallthru
    _
  // Predicated region
  $region38: #{discrete_policy_forward.1} parent=0 // pred_check
    _
  $region39: #{discrete_policy_forward.1} parent=0 // pred_check_branch
    %349 = sbr.rel (0) target = $region41
  $region40: #{discrete_policy_forward.1} parent=0 // pred_region
    _
  $region41: #{discrete_policy_forward.1} parent=0 // pred_fallthru
    _
  // Predicated region
  $region42: #{discrete_policy_forward.1} parent=0 // pred_check
    _
  $region43: #{discrete_policy_forward.1} parent=0 // pred_check_branch
    %351 = sbr.rel (0) target = $region45
  $region44: #{discrete_policy_forward.1} parent=0 // pred_region
    _
  $region45: #{discrete_policy_forward.1} parent=0 // pred_fallthru
    _

</llo_original>
